<compile_context>
chip_gen: v7x
topology: tpu7x:2x2x1
jax: 0.10.0
libtpu: 0.0.40
codegen_flags: <defaults>
</compile_context>

<pallas_src>
import functools

import jax
import jax.numpy as jnp
from jax.experimental import pallas as pl
from jax.experimental.pallas import tpu as pltpu

_BN_EPS = 1e-5
_PAD_MODE = {"zeros": "constant", "reflect": "reflect",
             "replicate": "edge", "circular": "wrap"}


# ----------------------------------------------------------------------------
# helpers
# ----------------------------------------------------------------------------
def _round_up(x, m):
    return ((x + m - 1) // m) * m


def _cdiv(a, b):
    return (a + b - 1) // b


def _pad_2d(a, rows, cols):
    r, c = a.shape
    if r == rows and c == cols:
        return a
    return jnp.pad(a, ((0, rows - r), (0, cols - c)))


def _vmem_budget():
    """Generation-aware VMEM policy (v5e/v6e: 128 MiB physical, v7x: 64 MiB)."""
    cap = 64 * 1024 * 1024                       # conservative fallback (v7x)
    try:
        cap = int(pltpu.get_tpu_info().vmem_capacity_bytes)
    except Exception:
        pass
    limit = min(cap * 3 // 4, 100 * 1024 * 1024)  # vmem_limit_bytes for Mosaic
    budget = min(cap // 2, 72 * 1024 * 1024)      # what the tiler may fill
    return limit, budget


_VMEM_LIMIT, _VMEM_BUDGET = _vmem_budget()


def _compiler_params(semantics):
    return pltpu.CompilerParams(dimension_semantics=semantics,
                                vmem_limit_bytes=_VMEM_LIMIT)


def _bspec(block_shape, index_map, *, single_buffer=False):
    # Constant-index blocks (resident weight, BN scale/shift) don't need double
    # buffering; reclaiming that VMEM goes straight into larger row tiles.
    if single_buffer and hasattr(pl, "Buffered"):
        try:
            return pl.BlockSpec(block_shape, index_map,
                                pipeline_mode=pl.Buffered(1))
        except TypeError:
            pass
    return pl.BlockSpec(block_shape, index_map)


def _choose_tiles(m, k, cp, budget=_VMEM_BUDGET):
    """Pick (tile_m, tile_k, mp, kp).

    The weight gets at most half the budget; K is tiled (reduction grid axis)
    only when the resident, worst-case double-buffered bf16 weight would not
    fit.  The remaining budget sizes the row tile.
    """
    w_budget = budget // 2
    if 2 * k * cp * 2 <= w_budget:                 # resident weight fits
        kp = _round_up(k, 8)
        tile_k = kp
        w_bytes = 2 * kp * cp * 2
    else:                                          # K-tiled reduction
        tile_k = max(128, (w_budget // (2 * cp * 2) // 128) * 128)
        kp = _round_up(k, tile_k)
        tile_k = min(tile_k, kp)
        w_bytes = 2 * tile_k * cp * 2

    avail = max(budget - w_bytes, 0)
    # bf16 patches x2 bufs + bf16 out x2 bufs + f32 accumulator scratch
    per_row = 2 * tile_k * 2 + 2 * cp * 2 + cp * 4
    tile_m = max(16, min(2048, (avail // per_row) // 16 * 16))

    m16 = _round_up(m, 16)
    tile_m = min(tile_m, m16)
    # v7x megacore: keep >= 2 "parallel" row tiles for big layers (the extra
    # ~0.35us grid step is noise at >=512-row tiles on v5e/v6e).
    if m16 >= 1024:
        tile_m = min(tile_m, _round_up(_cdiv(m16, 2), 16))
    mp = _round_up(m, tile_m)
    return tile_m, tile_k, mp, kp


# ----------------------------------------------------------------------------
# Pallas kernels
# ----------------------------------------------------------------------------
def _gemm_kernel(x_ref, w_ref, o_ref, acc_ref, *, slope):
    # (tile_m, tile_k) @ (tile_k, cp) on the MXU, f32 accumulate over the
    # K grid axis, fused LeakyReLU, bf16 store.
    kk = pl.program_id(1)

    @pl.when(kk == 0)
    def _():
        acc_ref[...] = jnp.zeros_like(acc_ref)

    acc_ref[...] += jnp.dot(x_ref[...], w_ref[...],
                            preferred_element_type=jnp.float32)

    @pl.when(kk == pl.num_programs(1) - 1)
    def _():
        acc = acc_ref[...]
        if slope is not None:
            acc = jnp.where(acc > 0, acc, slope * acc)
        o_ref[...] = acc.astype(o_ref.dtype)


def _gemm_stats_kernel(x_ref, w_ref, o_ref, sum_ref, sq_ref, acc_ref):
    # Same tiled GEMM, but also emits per-row-tile partial BN statistics
    # (sum, sum^2) computed from the f32 accumulator before the bf16 cast.
    kk = pl.program_id(1)

    @pl.when(kk == 0)
    def _():
        acc_ref[...] = jnp.zeros_like(acc_ref)

    acc_ref[...] += jnp.dot(x_ref[...], w_ref[...],
                            preferred_element_type=jnp.float32)

    @pl.when(kk == pl.num_programs(1) - 1)
    def _():
        acc = acc_ref[...]
        o_ref[...] = acc.astype(o_ref.dtype)
        s = jnp.sum(acc, axis=0, keepdims=True)
        q = jnp.sum(acc * acc, axis=0, keepdims=True)
        sum_ref[...] = jnp.broadcast_to(s, sum_ref.shape)
        sq_ref[...] = jnp.broadcast_to(q, sq_ref.shape)


def _bn_act_kernel(x_ref, scale_ref, shift_ref, o_ref, *, slope):
    # Elementwise affine (folded BatchNorm) + LeakyReLU, f32 math, bf16 store.
    y = x_ref[...].astype(jnp.float32) * scale_ref[...] + shift_ref[...]
    y = jnp.where(y > 0, y, slope * y)
    o_ref[...] = y.astype(o_ref.dtype)


# ----------------------------------------------------------------------------
# Pallas wrappers (padding / tiling glue)
# ----------------------------------------------------------------------------
def gemm_act(patches, w_mat, slope):
    """bf16 out[M, C] = LeakyReLU(patches @ w_mat), M-tiled (+K-tiled if big)."""
    m, k = patches.shape
    _, c = w_mat.shape
    cp = _round_up(c, 128)
    tile_m, tile_k, mp, kp = _choose_tiles(m, k, cp)
    grid_m, grid_k = mp // tile_m, kp // tile_k
    w_const = grid_k == 1

    x = _pad_2d(patches.astype(jnp.bfloat16), mp, kp)
    w = _pad_2d(w_mat.astype(jnp.bfloat16), kp, cp)

    out = pl.pallas_call(
        functools.partial(_gemm_kernel, slope=slope),
        out_shape=jax.ShapeDtypeStruct((mp, cp), jnp.bfloat16),
        grid=(grid_m, grid_k),
        in_specs=[pl.BlockSpec((tile_m, tile_k), lambda i, kk: (i, kk)),
                  _bspec((tile_k, cp), lambda i, kk: (kk, 0),
                         single_buffer=w_const)],
        out_specs=pl.BlockSpec((tile_m, cp), lambda i, kk: (i, 0)),
        scratch_shapes=[pltpu.VMEM((tile_m, cp), jnp.float32)],
        compiler_params=_compiler_params(("parallel", "arbitrary")),
    )(x, w)
    return out[:m, :c]


def gemm_bn_act(patches, w_mat, gamma, beta, slope):
    """Conv-as-GEMM + training-mode BatchNorm + LeakyReLU, two tiled passes."""
    m, k = patches.shape
    _, c = w_mat.shape
    cp = _round_up(c, 128)
    tile_m, tile_k, mp, kp = _choose_tiles(m, k, cp)
    grid_m, grid_k = mp // tile_m, kp // tile_k
    w_const = grid_k == 1

    x = _pad_2d(patches.astype(jnp.bfloat16), mp, kp)
    w = _pad_2d(w_mat.astype(jnp.bfloat16), kp, cp)

    # ---- pass 1: tiled GEMM + per-tile partial sums / sums-of-squares -------
    y, psum, psq = pl.pallas_call(
        _gemm_stats_kernel,
        out_shape=(jax.ShapeDtypeStruct((mp, cp), jnp.bfloat16),
                   jax.ShapeDtypeStruct((grid_m * 8, cp), jnp.float32),
                   jax.ShapeDtypeStruct((grid_m * 8, cp), jnp.float32)),
        grid=(grid_m, grid_k),
        in_specs=[pl.BlockSpec((tile_m, tile_k), lambda i, kk: (i, kk)),
                  _bspec((tile_k, cp), lambda i, kk: (kk, 0),
                         single_buffer=w_const)],
        out_specs=(pl.BlockSpec((tile_m, cp), lambda i, kk: (i, 0)),
                   pl.BlockSpec((8, cp), lambda i, kk: (i, 0)),
                   pl.BlockSpec((8, cp), lambda i, kk: (i, 0))),
        scratch_shapes=[pltpu.VMEM((tile_m, cp), jnp.float32)],
        compiler_params=_compiler_params(("parallel", "arbitrary")),
    )(x, w)

    # ---- tiny cross-tile reduction + scale/shift fold (C floats, f32) -------
    # Zero-padded M rows and C columns contribute exactly 0 to sum and sum^2,
    # so dividing by the true M keeps the statistics exact.
    total_sum = psum.reshape(grid_m, 8, cp)[:, 0, :].sum(axis=0)
    total_sq = psq.reshape(grid_m, 8, cp)[:, 0, :].sum(axis=0)
    mean = total_sum / m
    var = jnp.maximum(total_sq / m - mean * mean, 0.0)   # clamp catastrophic cancel
    g = jnp.pad(gamma.astype(jnp.float32), (0, cp - c))
    b = jnp.pad(beta.astype(jnp.float32), (0, cp - c))
    scale = g * jax.lax.rsqrt(var + _BN_EPS)
    shift = b - mean * scale

    # ---- pass 2: tiled normalize + LeakyReLU, bf16 in / bf16 out ------------
    out = pl.pallas_call(
        functools.partial(_bn_act_kernel, slope=slope),
        out_shape=jax.ShapeDtypeStruct((mp, cp), jnp.bfloat16),
        grid=(grid_m,),
        in_specs=[pl.BlockSpec((tile_m, cp), lambda i: (i, 0)),
                  _bspec((1, cp), lambda i: (0, 0), single_buffer=True),
                  _bspec((1, cp), lambda i: (0, 0), single_buffer=True)],
        out_specs=pl.BlockSpec((tile_m, cp), lambda i: (i, 0)),
        compiler_params=_compiler_params(("parallel",)),
    )(y, scale.reshape(1, cp), shift.reshape(1, cp))
    return out[:m, :c]


# ----------------------------------------------------------------------------
# Glue: padding + im2col (layout only; compute stays in the kernels)
# ----------------------------------------------------------------------------
# TODO(synk): im2col is still materialized in HBM by XLA (now in bf16); a true
# in-kernel halo-DMA im2col (memory_space=pl.ANY input) would cut first-layer
# HBM reads ~4x and is the remaining structural win.
# TODO(synk): channel padding is not carried between layers; doing so is only
# profitable when C_out is already a multiple of 128 (otherwise it inflates the
# next layer's K by cp/c), so the out[:m, :c] slice is kept.
def _im2col(x_nhwc, k, stride, pad, padding_mode):
    if pad > 0:
        x_nhwc = jnp.pad(x_nhwc, ((0, 0), (pad, pad), (pad, pad), (0, 0)),
                         mode=_PAD_MODE[padding_mode])
    n, h, w, c = x_nhwc.shape
    ho = (h - k) // stride + 1
    wo = (w - k) // stride + 1
    cols = []
    for i in range(k):
        for j in range(k):
            cols.append(x_nhwc[:, i:i + stride * ho:stride, j:j + stride * wo:stride, :])
    p = jnp.stack(cols, axis=-1)                 # (N, Ho, Wo, C, k*k)
    p = p.reshape(n, ho, wo, c, k, k)            # (C, kH, kW) ordering == PyTorch flatten
    return p.reshape(n * ho * wo, c * k * k), (n, ho, wo)


def _conv2d_pallas(x_nhwc, layer, padding_mode):
    c_out, c_in, k, _ = layer["w"].shape
    patches, (n, ho, wo) = _im2col(x_nhwc, k, layer["stride"], layer["pad"], padding_mode)
    w_mat = layer["w"].reshape(c_out, c_in * k * k).T        # (K, C_out)
    if layer["bn"]:
        out = gemm_bn_act(patches, w_mat, layer["gamma"], layer["beta"], layer["slope"])
    else:
        out = gemm_act(patches, w_mat, layer["slope"])
    return out.reshape(n, ho, wo, c_out)


def _conv2d_plain(x_nhwc, w_pt, stride, pad, padding_mode):
    # Final 1-output-channel conv: a few hundred FLOPs, done with plain jnp.dot.
    c_out, c_in, k, _ = w_pt.shape
    patches, (n, ho, wo) = _im2col(x_nhwc, k, stride, pad, padding_mode)
    w_mat = w_pt.reshape(c_out, c_in * k * k).T
    out = jnp.dot(patches.astype(jnp.float32), w_mat,
                  preferred_element_type=jnp.float32)
    return out.reshape(n, ho, wo, c_out)


# ----------------------------------------------------------------------------
# Parameter construction (deterministic, DCGAN-style init)
# ----------------------------------------------------------------------------
def init_discriminator_params(key, img_size, img_ratio, num_img_channels,
                              base_num_out_channels):
    max_factor = img_size // 8
    layers = []

    key, kw = jax.random.split(key)
    layers.append(dict(
        w=0.02 * jax.random.normal(kw, (base_num_out_channels, num_img_channels, 4, 4),
                                   jnp.float32),
        gamma=jnp.ones((base_num_out_channels,), jnp.float32),
        beta=jnp.zeros((base_num_out_channels,), jnp.float32),
        stride=2, pad=1, bn=False, slope=0.2))

    factor = 1
    in_c = base_num_out_channels
    while factor < max_factor:
        out_c = base_num_out_channels * factor * 2
        key, kw, kg, kb = jax.random.split(key, 4)
        layers.append(dict(
            w=0.02 * jax.random.normal(kw, (out_c, in_c, 4, 4), jnp.float32),
            gamma=1.0 + 0.02 * jax.random.normal(kg, (out_c,), jnp.float32),
            beta=0.02 * jax.random.normal(kb, (out_c,), jnp.float32),
            stride=2, pad=1, bn=True, slope=0.2))
        factor *= 2
        in_c = out_c

    key, kw = jax.random.split(key)
    layers.append(dict(
        w=0.02 * jax.random.normal(kw, (1, in_c, 4, 4), jnp.float32),
        gamma=jnp.ones((1,), jnp.float32),
        beta=jnp.zeros((1,), jnp.float32),
        stride=1, pad=0, bn=False, slope=None))

    linear = None
    if img_ratio > 1:
        key, kl, kb = jax.random.split(key, 3)
        linear = dict(
            w=0.02 * jax.random.normal(kl, (1, 1 * img_ratio * 1), jnp.float32),
            b=jnp.zeros((1,), jnp.float32))
    return dict(convs=layers, linear=linear)


# ----------------------------------------------------------------------------
# Forward pass (mirrors Discriminator.forward / self.main Sequential)
# ----------------------------------------------------------------------------
def discriminator_forward(x_nchw, params, padding_mode="zeros"):
    # NCHW -> NHWC, cast to bf16 up front so the im2col stack moves bf16 bytes.
    x = jnp.transpose(x_nchw, (0, 2, 3, 1)).astype(jnp.bfloat16)
    for layer in params["convs"]:
        if (not layer["bn"]) and (layer["slope"] is None):
            # _Output conv (C_out=1): stays out of Pallas (1-lane output, tiny GEMM).
            x = _conv2d_plain(x, layer["w"], layer["stride"], layer["pad"], padding_mode)
        else:
            x = _conv2d_pallas(x, layer, padding_mode)
    if params["linear"] is not None:
        # _Output branch for img_ratio > 1: Flatten (NCHW order) then Linear.
        n = x.shape[0]
        flat = jnp.transpose(x, (0, 3, 1, 2)).reshape(n, -1).astype(jnp.float32)
        y = jnp.dot(flat, params["linear"]["w"].T,
                    preferred_element_type=jnp.float32)
        return y + params["linear"]["b"][None, :]
    # img_ratio == 1 branch: output of the last Conv2d, back to NCHW like PyTorch.
    return jnp.transpose(x, (0, 3, 1, 2))


# TODO(synk): nn.BatchNorm2d running-stat (momentum) buffer updates are stateful
# training bookkeeping and are not reproduced; only the forward normalization is.

if __name__ == "__main__":
    # Small but architecture-consistent configuration:
    #   img_size=16 -> max_factor=2 -> layers: FromImage, one _Block, _Output conv.
    batch = 2
    num_img_channels = 4
    img_size = 16
    img_ratio = 1
    base_num_out_channels = 8
    padding_mode = "zeros"

    key = jax.random.PRNGKey(0)
    key, kx = jax.random.split(key)
    x = jax.random.normal(kx, (batch, num_img_channels, img_size, img_size * img_ratio),
                          jnp.float32)

    params = init_discriminator_params(key, img_size, img_ratio, num_img_channels,
                                       base_num_out_channels)

    out = discriminator_forward(x, params, padding_mode=padding_mode)
    out = jax.block_until_ready(out)
    assert out.shape == (batch, 1, 1, 1), out.shape
    assert bool(jnp.all(jnp.isfinite(out))), "non-finite output"
    print("KERNEL_OK")
</pallas_src>

<mosaic_0001>
module attributes {stable_mosaic.version = 11 : i64} {
  func.func @_gemm_kernel(%arg0: i32, %arg1: i32, %arg2: memref<128x64xbf16, #tpu.memory_space<vmem>>, %arg3: memref<64x128xbf16, #tpu.memory_space<vmem>>, %arg4: memref<128x128xbf16, #tpu.memory_space<vmem>>, %arg5: memref<128x128xf32, #tpu.memory_space<vmem>>) attributes {dimension_semantics = [#tpu.dimension_semantics<parallel>, #tpu.dimension_semantics<arbitrary>], iteration_bounds = array<i64: 1, 1>, scalar_prefetch = 0 : i64, scratch_operands = 1 : i64, tpu.core_type = #tpu.core_type<tc>, window_params = [{transform_indices = @transform_0, window_bounds = array<i64: 128, 64>}, {pipeline_mode = #tpu.pipeline_mode<synchronous>, transform_indices = @transform_1, window_bounds = array<i64: 64, 128>}, {transform_indices = @transform_2, window_bounds = array<i64: 128, 128>}]} {
    %c0_i32 = arith.constant 0 : i32
    %0 = arith.cmpi eq, %arg1, %c0_i32 : i32
    %1 = arith.extui %0 : i1 to i32
    %c0_i32_0 = arith.constant 0 : i32
    %2 = arith.cmpi ne, %1, %c0_i32_0 : i32
    scf.if %2 {
      %cst_10 = arith.constant 0.000000e+00 : f32
      %12 = vector.broadcast %cst_10 : f32 to vector<128x128xf32>
      %c0_11 = arith.constant 0 : index
      %c0_12 = arith.constant 0 : index
      %13 = vector.load %arg5[%c0_11, %c0_12] : memref<128x128xf32, #tpu.memory_space<vmem>>, vector<128x128xf32>
      tpu.vector_store %arg5[%c0_11, %c0_12], %12 {strides = array<i32>} : memref<128x128xf32, #tpu.memory_space<vmem>>, vector<128x128xf32>,
    } else {
    }
    %c0 = arith.constant 0 : index
    %c0_1 = arith.constant 0 : index
    %3 = vector.load %arg5[%c0, %c0_1] : memref<128x128xf32, #tpu.memory_space<vmem>>, vector<128x128xf32>
    %c0_2 = arith.constant 0 : index
    %c0_3 = arith.constant 0 : index
    %4 = vector.load %arg2[%c0_2, %c0_3] : memref<128x64xbf16, #tpu.memory_space<vmem>>, vector<128x64xbf16>
    %c0_4 = arith.constant 0 : index
    %c0_5 = arith.constant 0 : index
    %5 = vector.load %arg3[%c0_4, %c0_5] : memref<64x128xbf16, #tpu.memory_space<vmem>>, vector<64x128xbf16>
    %cst = arith.constant dense<0.000000e+00> : vector<128x128xf32>
    %6 = tpu.matmul %4, %5, %cst {dimension_numbers = #tpu.dot_dimension_numbers<[1], [0], [0], [1], [0, 0, 1, 1], [], []>} : vector<128x64xbf16>, vector<64x128xbf16>, vector<128x128xf32> -> vector<128x128xf32>
    %7 = arith.addf %3, %6 : vector<128x128xf32>
    %c0_6 = arith.constant 0 : index
    %c0_7 = arith.constant 0 : index
    %8 = vector.load %arg5[%c0_6, %c0_7] : memref<128x128xf32, #tpu.memory_space<vmem>>, vector<128x128xf32>
    tpu.vector_store %arg5[%c0_6, %c0_7], %7 {strides = array<i32>} : memref<128x128xf32, #tpu.memory_space<vmem>>, vector<128x128xf32>,
    %c0_i32_8 = arith.constant 0 : i32
    %9 = arith.cmpi eq, %arg1, %c0_i32_8 : i32
    %10 = arith.extui %9 : i1 to i32
    %c0_i32_9 = arith.constant 0 : i32
    %11 = arith.cmpi ne, %10, %c0_i32_9 : i32
    scf.if %11 {
      %c0_10 = arith.constant 0 : index
      %c0_11 = arith.constant 0 : index
      %12 = vector.load %arg5[%c0_10, %c0_11] : memref<128x128xf32, #tpu.memory_space<vmem>>, vector<128x128xf32>
      %cst_12 = arith.constant 0.000000e+00 : f32
      %13 = vector.broadcast %cst_12 : f32 to vector<128x128xf32>
      %14 = arith.cmpf ogt, %12, %13 : vector<128x128xf32>
      %cst_13 = arith.constant 2.000000e-01 : f32
      %15 = vector.broadcast %cst_13 : f32 to vector<128x128xf32>
      %16 = arith.mulf %15, %12 : vector<128x128xf32>
      %17 = arith.select %14, %12, %16 : vector<128x128xi1>, vector<128x128xf32>
      %18 = arith.truncf %17 : vector<128x128xf32> to vector<128x128xbf16>
      %c0_14 = arith.constant 0 : index
      %c0_15 = arith.constant 0 : index
      %19 = vector.load %arg4[%c0_14, %c0_15] : memref<128x128xbf16, #tpu.memory_space<vmem>>, vector<128x128xbf16>
      tpu.vector_store %arg4[%c0_14, %c0_15], %18 {strides = array<i32>} : memref<128x128xbf16, #tpu.memory_space<vmem>>, vector<128x128xbf16>,
    } else {
    }
    return
  }
  func.func @transform_0(%arg0: i32, %arg1: i32) -> (i32, i32) {
    %c0_i32 = arith.constant 0 : i32
    return %arg0, %arg1 : i32, i32
  }
  func.func @transform_1(%arg0: i32, %arg1: i32) -> (i32, i32) {
    %c0_i32 = arith.constant 0 : i32
    %c0_i32_0 = arith.constant 0 : i32
    return %arg1, %c0_i32 : i32, i32
  }
  func.func @transform_2(%arg0: i32, %arg1: i32) -> (i32, i32) {
    %c0_i32 = arith.constant 0 : i32
    %c0_i32_0 = arith.constant 0 : i32
    return %arg0, %c0_i32 : i32, i32
  }
}

</mosaic_0001>

<llo_original>
// kernel: tpu_custom_call.1
$region0: #{tpu_custom_call.1}
  #allocation0 [shape = 'u32[]', space=smem, size = 0x4, offset = 0x4, fixed_abs, tag = 'smem constant byte address 0x4 - core index']
  #allocation1 [shape = 'u32[144,128]{1,0:T(1,128)}', space=vmem, size = 0x12000, scoped, tag = 'internal scratch']
  #allocation2 [shape = 'f32[128,128]{1,0:T(8,128)}', space=vmem, size = 0x10000, scoped, tag = 'scratch operand']
  %s0 = inlined_call_operand.vmem [shape: bf16[128,64], index: 0, kind: input, shape index: {}]
  %s1 = inlined_call_operand.vmem [shape: bf16[64,128], index: 1, kind: input, shape index: {}]
  %s2 = inlined_call_operand.hbm [shape: bf16[128,128], index: 2, kind: output, shape index: {}]
  %s3 = sld [smem:[#allocation0]]
  $region26: #{tpu_custom_call.1} parent=0
    _
  %s5 = ssub.s32 1, %s3
  %s6 = scalar_select 0, %s5, %s3
  $region1: #{tpu_custom_call.1} parent=0
    #allocation3 [shape = 'u8[32768]{0}', space=vmem, size = 0x8000, scoped, tag = 'output window, operand 0, single buffered']
    #allocation4 [shape = 's32[1]{0}', space=sflag, size = 0x4, scoped, tag = 'scoped memory for tpu_custom_call.1']
    %7 = vsyncpa [#allocation4], 0
    // Predicated region
    $region2: #{tpu_custom_call.1} parent=1 // pred_check
      _
    $region3: #{tpu_custom_call.1} parent=1 // pred_check_branch
      %9 = sbr.rel (0) target = $region5
    $region4: #{tpu_custom_call.1} parent=1 // pred_region
      _
    $region5: #{tpu_custom_call.1} parent=1 // pred_fallthru
      _
    // Predicated region
    $region6: #{tpu_custom_call.1} parent=1 // pred_check
      _
    $region7: #{tpu_custom_call.1} parent=1 // pred_check_branch
      %11 = sbr.rel (0) target = $region9
    $region8: #{tpu_custom_call.1} parent=1 // pred_region
      _
    $region9: #{tpu_custom_call.1} parent=1 // pred_fallthru
      _
    %p13 = scmp.eq.s32.totalorder 0, 0
    // Predicated region
    $region10: #{tpu_custom_call.1} parent=1 // pred_check
      %p14 = pneg %p13
    $region11: #{tpu_custom_call.1} parent=1 // pred_check_branch
      %16 = sbr.rel (%p14) target = $region13
    $region12: #{tpu_custom_call.1} parent=1 // pred_region
      %17 = vst [vmem:[#allocation2] sm:$0xff] 0.0
      %18 = vst [vmem:[#allocation2 + $0x8] sm:$0xff] 0.0
      %19 = vst [vmem:[#allocation2 + $0x10] sm:$0xff] 0.0
      %20 = vst [vmem:[#allocation2 + $0x18] sm:$0xff] 0.0
      %21 = vst [vmem:[#allocation2 + $0x20] sm:$0xff] 0.0
      %22 = vst [vmem:[#allocation2 + $0x28] sm:$0xff] 0.0
      %23 = vst [vmem:[#allocation2 + $0x30] sm:$0xff] 0.0
      %24 = vst [vmem:[#allocation2 + $0x38] sm:$0xff] 0.0
      %25 = vst [vmem:[#allocation2 + $0x40] sm:$0xff] 0.0
      %26 = vst [vmem:[#allocation2 + $0x48] sm:$0xff] 0.0
      %27 = vst [vmem:[#allocation2 + $0x50] sm:$0xff] 0.0
      %28 = vst [vmem:[#allocation2 + $0x58] sm:$0xff] 0.0
      %29 = vst [vmem:[#allocation2 + $0x60] sm:$0xff] 0.0
      %30 = vst [vmem:[#allocation2 + $0x68] sm:$0xff] 0.0
      %31 = vst [vmem:[#allocation2 + $0x70] sm:$0xff] 0.0
      %32 = vst [vmem:[#allocation2 + $0x78] sm:$0xff] 0.0
    $region13: #{tpu_custom_call.1} parent=1 // pred_fallthru
      _
    %v33 = vld [vmem:[#allocation2] sm:$0xff]
    %v34 = vld [vmem:[#allocation2 + $0x8] sm:$0xff]
    %v35 = vld [vmem:[#allocation2 + $0x10] sm:$0xff]
    %v36 = vld [vmem:[#allocation2 + $0x18] sm:$0xff]
    %v37 = vld [vmem:[#allocation2 + $0x20] sm:$0xff]
    %v38 = vld [vmem:[#allocation2 + $0x28] sm:$0xff]
    %v39 = vld [vmem:[#allocation2 + $0x30] sm:$0xff]
    %v40 = vld [vmem:[#allocation2 + $0x38] sm:$0xff]
    %v41 = vld [vmem:[#allocation2 + $0x40] sm:$0xff]
    %v42 = vld [vmem:[#allocation2 + $0x48] sm:$0xff]
    %v43 = vld [vmem:[#allocation2 + $0x50] sm:$0xff]
    %v44 = vld [vmem:[#allocation2 + $0x58] sm:$0xff]
    %v45 = vld [vmem:[#allocation2 + $0x60] sm:$0xff]
    %v46 = vld [vmem:[#allocation2 + $0x68] sm:$0xff]
    %v47 = vld [vmem:[#allocation2 + $0x70] sm:$0xff]
    %v48 = vld [vmem:[#allocation2 + $0x78] sm:$0xff]
    %v49 = vld [vmem:[%s0] sm:$0xf]
    %v50 = vld [vmem:[%s0 + $0x4] sm:$0xf]
    %v51 = vld [vmem:[%s0 + $0x8] sm:$0xf]
    %v52 = vld [vmem:[%s0 + $0xc] sm:$0xf]
    %v53 = vld [vmem:[%s0 + $0x10] sm:$0xf]
    %v54 = vld [vmem:[%s0 + $0x14] sm:$0xf]
    %v55 = vld [vmem:[%s0 + $0x18] sm:$0xf]
    %v56 = vld [vmem:[%s0 + $0x1c] sm:$0xf]
    %v57 = vld [vmem:[%s0 + $0x20] sm:$0xf]
    %v58 = vld [vmem:[%s0 + $0x24] sm:$0xf]
    %v59 = vld [vmem:[%s0 + $0x28] sm:$0xf]
    %v60 = vld [vmem:[%s0 + $0x2c] sm:$0xf]
    %v61 = vld [vmem:[%s0 + $0x30] sm:$0xf]
    %v62 = vld [vmem:[%s0 + $0x34] sm:$0xf]
    %v63 = vld [vmem:[%s0 + $0x38] sm:$0xf]
    %v64 = vld [vmem:[%s0 + $0x3c] sm:$0xf]
    %v65 = vld [vmem:[%s1] sm:$0xf]
    %v66 = vld [vmem:[%s1 + $0x4] sm:$0xf]
    %v67 = vld [vmem:[%s1 + $0x8] sm:$0xf]
    %v68 = vld [vmem:[%s1 + $0xc] sm:$0xf]
    %v69 = vld [vmem:[%s1 + $0x10] sm:$0xf]
    %v70 = vld [vmem:[%s1 + $0x14] sm:$0xf]
    %v71 = vld [vmem:[%s1 + $0x18] sm:$0xf]
    %v72 = vld [vmem:[%s1 + $0x1c] sm:$0xf]
    %v89 = vunpack.c.l.b16 %v49
    %v90 = vunpack.c.l.b16 %v50
    %v91 = vunpack.c.l.b16 %v51
    %v92 = vunpack.c.l.b16 %v52
    %v93 = vunpack.c.l.b16 %v53
    %v94 = vunpack.c.l.b16 %v54
    %v95 = vunpack.c.l.b16 %v55
    %v96 = vunpack.c.l.b16 %v56
    %v97 = vunpack.c.l.b16 %v57
    %v98 = vunpack.c.l.b16 %v58
    %v99 = vunpack.c.l.b16 %v59
    %v100 = vunpack.c.l.b16 %v60
    %v101 = vunpack.c.l.b16 %v61
    %v102 = vunpack.c.l.b16 %v62
    %v103 = vunpack.c.l.b16 %v63
    %v104 = vunpack.c.l.b16 %v64
    %v105 = vpack.c.b16 %v90, %v89
    %v106 = vpack.c.b16 %v92, %v91
    %v107 = vpack.c.b16 %v94, %v93
    %v108 = vpack.c.b16 %v96, %v95
    %v109 = vpack.c.b16 %v98, %v97
    %v110 = vpack.c.b16 %v100, %v99
    %v111 = vpack.c.b16 %v102, %v101
    %v112 = vpack.c.b16 %v104, %v103
    %v121 = vunpack.c.l.b16 %v65
    %v122 = vunpack.c.l.b16 %v66
    %v123 = vunpack.c.l.b16 %v67
    %v124 = vunpack.c.l.b16 %v68
    %v125 = vunpack.c.l.b16 %v69
    %v126 = vunpack.c.l.b16 %v70
    %v127 = vunpack.c.l.b16 %v71
    %v128 = vunpack.c.l.b16 %v72
    %v129 = vpack.c.b16 %v122, %v121
    %v130 = vpack.c.b16 %v124, %v123
    %v131 = vpack.c.b16 %v126, %v125
    %v132 = vpack.c.b16 %v128, %v127
    %vm137 = vcmask 523264
    %v139 = vsel %vm137, %v105, 0
    %v142 = vsel %vm137, %v106, 0
    %v145 = vsel %vm137, %v107, 0
    %v148 = vsel %vm137, %v108, 0
    %v151 = vsel %vm137, %v109, 0
    %v154 = vsel %vm137, %v110, 0
    %v157 = vsel %vm137, %v111, 0
    %v160 = vsel %vm137, %v112, 0
    %162 = vmatprep.subr.bf16.mxu0 0
    %163 = vmatpush1.bf16.msra.mxu0 %v129
    %164 = vmatprep.subr.bf16.mxu0 0
    %165 = vmatpush1.bf16.msra.mxu0 %v130
    %166 = vmatprep.subr.bf16.mxu0 0
    %167 = vmatpush1.bf16.msra.mxu0 %v131
    %168 = vmatprep.subr.bf16.mxu0 0
    %169 = vmatpush1.bf16.msra.mxu0 %v132
    %170 = vmatprep.subr.bf16.mxu0 0
    %171 = vmatpush1.bf16.msra.mxu0 0
    %172 = vmatprep.subr.bf16.mxu0 0
    %173 = vmatpush1.bf16.msra.mxu0 0
    %174 = vmatprep.subr.bf16.mxu0 0
    %175 = vmatpush1.bf16.msra.mxu0 0
    %176 = vmatprep.subr.bf16.mxu0 0
    %177 = vmatpush1.bf16.msra.mxu0 0
    %178 = vmatprep.subr.bf16.mxu0 0
    %179 = vmatpush1.bf16.msra.mxu0 0
    %180 = vmatprep.subr.bf16.mxu0 0
    %181 = vmatpush1.bf16.msra.mxu0 0
    %182 = vmatprep.subr.bf16.mxu0 0
    %183 = vmatpush1.bf16.msra.mxu0 0
    %184 = vmatprep.subr.bf16.mxu0 0
    %185 = vmatpush1.bf16.msra.mxu0 0
    %186 = vmatprep.subr.bf16.mxu0 0
    %187 = vmatpush1.bf16.msra.mxu0 0
    %188 = vmatprep.subr.bf16.mxu0 0
    %189 = vmatpush1.bf16.msra.mxu0 0
    %190 = vmatprep.subr.bf16.mxu0 0
    %191 = vmatpush1.bf16.msra.mxu0 0
    %192 = vmatprep.subr.bf16.mxu0 0
    %193 = vmatpush1.bf16.msra.mxu0 0
    %194 = vmatprep.mubr.bf16.mxu0 0
    %195 = vmatmul.mubr.bf16.gmra.mrb[0].mxu0 %v139
    %v196 = vpop.f32.mrb[0].mxu0
    %v197 = vadd.f32 0.0, %v196
    %v198 = vpop.f32.mrb[0].mxu0
    %v199 = vpop.f32.mrb[0].mxu0
    %v200 = vadd.f32 0.0, %v199
    %v201 = vpop.f32.mrb[0].mxu0
    %202 = vmatprep.mubr.bf16.mxu0 0
    %203 = vmatmul.mubr.bf16.gmra.mrb[0].mxu0 %v142
    %v204 = vpop.f32.mrb[0].mxu0
    %v205 = vadd.f32 0.0, %v204
    %v206 = vpop.f32.mrb[0].mxu0
    %v207 = vpop.f32.mrb[0].mxu0
    %v208 = vadd.f32 0.0, %v207
    %v209 = vpop.f32.mrb[0].mxu0
    %210 = vmatprep.mubr.bf16.mxu0 0
    %211 = vmatmul.mubr.bf16.gmra.mrb[0].mxu0 %v145
    %v212 = vpop.f32.mrb[0].mxu0
    %v213 = vadd.f32 0.0, %v212
    %v214 = vpop.f32.mrb[0].mxu0
    %v215 = vpop.f32.mrb[0].mxu0
    %v216 = vadd.f32 0.0, %v215
    %v217 = vpop.f32.mrb[0].mxu0
    %218 = vmatprep.mubr.bf16.mxu0 0
    %219 = vmatmul.mubr.bf16.gmra.mrb[0].mxu0 %v148
    %v220 = vpop.f32.mrb[0].mxu0
    %v221 = vadd.f32 0.0, %v220
    %v222 = vpop.f32.mrb[0].mxu0
    %v223 = vpop.f32.mrb[0].mxu0
    %v224 = vadd.f32 0.0, %v223
    %v225 = vpop.f32.mrb[0].mxu0
    %226 = vmatprep.mubr.bf16.mxu0 0
    %227 = vmatmul.mubr.bf16.gmra.mrb[0].mxu0 %v151
    %v228 = vpop.f32.mrb[0].mxu0
    %v229 = vadd.f32 0.0, %v228
    %v230 = vpop.f32.mrb[0].mxu0
    %v231 = vpop.f32.mrb[0].mxu0
    %v232 = vadd.f32 0.0, %v231
    %v233 = vpop.f32.mrb[0].mxu0
    %234 = vmatprep.mubr.bf16.mxu0 0
    %235 = vmatmul.mubr.bf16.gmra.mrb[0].mxu0 %v154
    %v236 = vpop.f32.mrb[0].mxu0
    %v237 = vadd.f32 0.0, %v236
    %v238 = vpop.f32.mrb[0].mxu0
    %v239 = vpop.f32.mrb[0].mxu0
    %v240 = vadd.f32 0.0, %v239
    %v241 = vpop.f32.mrb[0].mxu0
    %242 = vmatprep.mubr.bf16.mxu0 0
    %243 = vmatmul.mubr.bf16.gmra.mrb[0].mxu0 %v157
    %v244 = vpop.f32.mrb[0].mxu0
    %v245 = vadd.f32 0.0, %v244
    %v246 = vpop.f32.mrb[0].mxu0
    %v247 = vpop.f32.mrb[0].mxu0
    %v248 = vadd.f32 0.0, %v247
    %v249 = vpop.f32.mrb[0].mxu0
    %250 = vmatprep.mubr.bf16.mxu0 0
    %251 = vmatmul.mubr.bf16.gmra.mrb[0].mxu0 %v160
    %v252 = vpop.f32.mrb[0].mxu0
    %v253 = vadd.f32 0.0, %v252
    %v254 = vpop.f32.mrb[0].mxu0
    %v255 = vpop.f32.mrb[0].mxu0
    %v256 = vadd.f32 0.0, %v255
    %v257 = vpop.f32.mrb[0].mxu0
    %258 = vdwg.mxu0
    %v259 = vadd.f32 %v33, %v197
    %v260 = vadd.f32 %v34, %v200
    %v261 = vadd.f32 %v35, %v205
    %v262 = vadd.f32 %v36, %v208
    %v263 = vadd.f32 %v37, %v213
    %v264 = vadd.f32 %v38, %v216
    %v265 = vadd.f32 %v39, %v221
    %v266 = vadd.f32 %v40, %v224
    %v267 = vadd.f32 %v41, %v229
    %v268 = vadd.f32 %v42, %v232
    %v269 = vadd.f32 %v43, %v237
    %v270 = vadd.f32 %v44, %v240
    %v271 = vadd.f32 %v45, %v245
    %v272 = vadd.f32 %v46, %v248
    %v273 = vadd.f32 %v47, %v253
    %v274 = vadd.f32 %v48, %v256
    %275 = vst [vmem:[#allocation2] sm:$0xff] %v259
    %276 = vst [vmem:[#allocation2 + $0x8] sm:$0xff] %v260
    %277 = vst [vmem:[#allocation2 + $0x10] sm:$0xff] %v261
    %278 = vst [vmem:[#allocation2 + $0x18] sm:$0xff] %v262
    %279 = vst [vmem:[#allocation2 + $0x20] sm:$0xff] %v263
    %280 = vst [vmem:[#allocation2 + $0x28] sm:$0xff] %v264
    %281 = vst [vmem:[#allocation2 + $0x30] sm:$0xff] %v265
    %282 = vst [vmem:[#allocation2 + $0x38] sm:$0xff] %v266
    %283 = vst [vmem:[#allocation2 + $0x40] sm:$0xff] %v267
    %284 = vst [vmem:[#allocation2 + $0x48] sm:$0xff] %v268
    %285 = vst [vmem:[#allocation2 + $0x50] sm:$0xff] %v269
    %286 = vst [vmem:[#allocation2 + $0x58] sm:$0xff] %v270
    %287 = vst [vmem:[#allocation2 + $0x60] sm:$0xff] %v271
    %288 = vst [vmem:[#allocation2 + $0x68] sm:$0xff] %v272
    %289 = vst [vmem:[#allocation2 + $0x70] sm:$0xff] %v273
    %290 = vst [vmem:[#allocation2 + $0x78] sm:$0xff] %v274
    // Predicated region
    $region14: #{tpu_custom_call.1} parent=1 // pred_check
      %p291 = pneg %p13
    $region15: #{tpu_custom_call.1} parent=1 // pred_check_branch
      %293 = sbr.rel (%p291) target = $region17
    $region16: #{tpu_custom_call.1} parent=1 // pred_region
      %v294 = vld [vmem:[#allocation2] sm:$0xff]
      %v295 = vld [vmem:[#allocation2 + $0x8] sm:$0xff]
      %v296 = vld [vmem:[#allocation2 + $0x10] sm:$0xff]
      %v297 = vld [vmem:[#allocation2 + $0x18] sm:$0xff]
      %v298 = vld [vmem:[#allocation2 + $0x20] sm:$0xff]
      %v299 = vld [vmem:[#allocation2 + $0x28] sm:$0xff]
      %v300 = vld [vmem:[#allocation2 + $0x30] sm:$0xff]
      %v301 = vld [vmem:[#allocation2 + $0x38] sm:$0xff]
      %v302 = vld [vmem:[#allocation2 + $0x40] sm:$0xff]
      %v303 = vld [vmem:[#allocation2 + $0x48] sm:$0xff]
      %v304 = vld [vmem:[#allocation2 + $0x50] sm:$0xff]
      %v305 = vld [vmem:[#allocation2 + $0x58] sm:$0xff]
      %v306 = vld [vmem:[#allocation2 + $0x60] sm:$0xff]
      %v307 = vld [vmem:[#allocation2 + $0x68] sm:$0xff]
      %v308 = vld [vmem:[#allocation2 + $0x70] sm:$0xff]
      %v309 = vld [vmem:[#allocation2 + $0x78] sm:$0xff]
      %vm310 = vcmp.gt.f32.partialorder %v294, 0.0
      %vm311 = vcmp.gt.f32.partialorder %v295, 0.0
      %vm312 = vcmp.gt.f32.partialorder %v296, 0.0
      %vm313 = vcmp.gt.f32.partialorder %v297, 0.0
      %vm314 = vcmp.gt.f32.partialorder %v298, 0.0
      %vm315 = vcmp.gt.f32.partialorder %v299, 0.0
      %vm316 = vcmp.gt.f32.partialorder %v300, 0.0
      %vm317 = vcmp.gt.f32.partialorder %v301, 0.0
      %vm318 = vcmp.gt.f32.partialorder %v302, 0.0
      %vm319 = vcmp.gt.f32.partialorder %v303, 0.0
      %vm320 = vcmp.gt.f32.partialorder %v304, 0.0
      %vm321 = vcmp.gt.f32.partialorder %v305, 0.0
      %vm322 = vcmp.gt.f32.partialorder %v306, 0.0
      %vm323 = vcmp.gt.f32.partialorder %v307, 0.0
      %vm324 = vcmp.gt.f32.partialorder %v308, 0.0
      %vm325 = vcmp.gt.f32.partialorder %v309, 0.0
      %v326 = vmul.f32 %v294, 0.2
      %v327 = vmul.f32 %v295, 0.2
      %v328 = vmul.f32 %v296, 0.2
      %v329 = vmul.f32 %v297, 0.2
      %v330 = vmul.f32 %v298, 0.2
      %v331 = vmul.f32 %v299, 0.2
      %v332 = vmul.f32 %v300, 0.2
      %v333 = vmul.f32 %v301, 0.2
      %v334 = vmul.f32 %v302, 0.2
      %v335 = vmul.f32 %v303, 0.2
      %v336 = vmul.f32 %v304, 0.2
      %v337 = vmul.f32 %v305, 0.2
      %v338 = vmul.f32 %v306, 0.2
      %v339 = vmul.f32 %v307, 0.2
      %v340 = vmul.f32 %v308, 0.2
      %v341 = vmul.f32 %v309, 0.2
      %v342 = vsel %vm310, %v294, %v326
      %v343 = vsel %vm311, %v295, %v327
      %v344 = vsel %vm312, %v296, %v328
      %v345 = vsel %vm313, %v297, %v329
      %v346 = vsel %vm314, %v298, %v330
      %v347 = vsel %vm315, %v299, %v331
      %v348 = vsel %vm316, %v300, %v332
      %v349 = vsel %vm317, %v301, %v333
      %v350 = vsel %vm318, %v302, %v334
      %v351 = vsel %vm319, %v303, %v335
      %v352 = vsel %vm320, %v304, %v336
      %v353 = vsel %vm321, %v305, %v337
      %v354 = vsel %vm322, %v306, %v338
      %v355 = vsel %vm323, %v307, %v339
      %v356 = vsel %vm324, %v308, %v340
      %v357 = vsel %vm325, %v309, %v341
      %v358 = vpack.c.bf16 %v343, %v342
      %v359 = vpack.c.bf16 %v345, %v344
      %v360 = vpack.c.bf16 %v347, %v346
      %v361 = vpack.c.bf16 %v349, %v348
      %v362 = vpack.c.bf16 %v351, %v350
      %v363 = vpack.c.bf16 %v353, %v352
      %v364 = vpack.c.bf16 %v355, %v354
      %v365 = vpack.c.bf16 %v357, %v356
      %v374 = vunpack.c.l.b16 %v358
      %v375 = vunpack.c.h.b16 %v358
      %v376 = vunpack.c.l.b16 %v359
      %v377 = vunpack.c.h.b16 %v359
      %v378 = vunpack.c.l.b16 %v360
      %v379 = vunpack.c.h.b16 %v360
      %v380 = vunpack.c.l.b16 %v361
      %v381 = vunpack.c.h.b16 %v361
      %v382 = vunpack.c.l.b16 %v362
      %v383 = vunpack.c.h.b16 %v362
      %v384 = vunpack.c.l.b16 %v363
      %v385 = vunpack.c.h.b16 %v363
      %v386 = vunpack.c.l.b16 %v364
      %v387 = vunpack.c.h.b16 %v364
      %v388 = vunpack.c.l.b16 %v365
      %v389 = vunpack.c.h.b16 %v365
      %v390 = vpack.c.b16 %v374, %v374
      %v391 = vpack.c.b16 %v375, %v375
      %v392 = vpack.c.b16 %v376, %v376
      %v393 = vpack.c.b16 %v377, %v377
      %v394 = vpack.c.b16 %v378, %v378
      %v395 = vpack.c.b16 %v379, %v379
      %v396 = vpack.c.b16 %v380, %v380
      %v397 = vpack.c.b16 %v381, %v381
      %v398 = vpack.c.b16 %v382, %v382
      %v399 = vpack.c.b16 %v383, %v383
      %v400 = vpack.c.b16 %v384, %v384
      %v401 = vpack.c.b16 %v385, %v385
      %v402 = vpack.c.b16 %v386, %v386
      %v403 = vpack.c.b16 %v387, %v387
      %v404 = vpack.c.b16 %v388, %v388
      %v405 = vpack.c.b16 %v389, %v389
      %422 = vst [vmem:[#allocation3] sm:$0xf] %v390
      %423 = vst [vmem:[#allocation3 + $0x4] sm:$0xf] %v391
      %424 = vst [vmem:[#allocation3 + $0x8] sm:$0xf] %v392
      %425 = vst [vmem:[#allocation3 + $0xc] sm:$0xf] %v393
      %426 = vst [vmem:[#allocation3 + $0x10] sm:$0xf] %v394
      %427 = vst [vmem:[#allocation3 + $0x14] sm:$0xf] %v395
      %428 = vst [vmem:[#allocation3 + $0x18] sm:$0xf] %v396
      %429 = vst [vmem:[#allocation3 + $0x1c] sm:$0xf] %v397
      %430 = vst [vmem:[#allocation3 + $0x20] sm:$0xf] %v398
      %431 = vst [vmem:[#allocation3 + $0x24] sm:$0xf] %v399
      %432 = vst [vmem:[#allocation3 + $0x28] sm:$0xf] %v400
      %433 = vst [vmem:[#allocation3 + $0x2c] sm:$0xf] %v401
      %434 = vst [vmem:[#allocation3 + $0x30] sm:$0xf] %v402
      %435 = vst [vmem:[#allocation3 + $0x34] sm:$0xf] %v403
      %436 = vst [vmem:[#allocation3 + $0x38] sm:$0xf] %v404
      %437 = vst [vmem:[#allocation3 + $0x3c] sm:$0xf] %v405
    $region17: #{tpu_custom_call.1} parent=1 // pred_fallthru
      _
    // Predicated region
    $region18: #{tpu_custom_call.1} parent=1 // pred_check
      _
    $region19: #{tpu_custom_call.1} parent=1 // pred_check_branch
      %439 = sbr.rel (0) target = $region21
    $region20: #{tpu_custom_call.1} parent=1 // pred_region
      %s441 = ssub.s32 1024, 1024
      %442 = vsyncadd [#allocation4], %s441
      %s443 = sshll.u32 [#allocation3], 4
      %s444 = int_to_ptr.vmem [resolvable:$true] %s443
      %449 = dma.vmem_to_hbm [thread:$0]  %s444, 1024, %s2, [#allocation4], 64, 64, 4
    $region21: #{tpu_custom_call.1} parent=1 // pred_fallthru
      _
    // Predicated region
    $region22: #{tpu_custom_call.1} parent=1 // pred_check
      _
    $region23: #{tpu_custom_call.1} parent=1 // pred_check_branch
      %451 = sbr.rel (0) target = $region25
    $region24: #{tpu_custom_call.1} parent=1 // pred_region
      %452 = dma.done [#allocation4], 1024
    $region25: #{tpu_custom_call.1} parent=1 // pred_fallthru
      _
    %453 = vsyncpa [#allocation4], 1

</llo_original>
